<compile_context>
chip_gen: v6e
topology: v6e:2x2x1
jax: 0.10.0
libtpu: 0.0.40
codegen_flags: <defaults>
</compile_context>

<pallas_src>
import functools

import numpy as np
import jax
import jax.numpy as jnp
from jax.experimental import pallas as pl
from jax.experimental.pallas import tpu as pltpu


# ----------------------------- gaussian helpers -----------------------------

def _gen_gaussian_kernel(k_size=5, sigma=1):
    # Identical math to init_gaussian_filter's inner _gen_gaussian_kernel.
    center = k_size // 2
    x, y = np.mgrid[0 - center:k_size - center, 0 - center:k_size - center]
    g = 1 / (2 * np.pi * sigma) * np.exp(
        -(np.square(x) + np.square(y)) / (2 * np.square(sigma)))
    return g.astype(np.float32)


def _gaussian_taps(k_size=5, sigma=1.0):
    """1-D factors of the (exactly separable) gaussian used by init_gaussian_filter.

    g[i, j] = (1/(2*pi*sigma)) * exp(-(i-c)^2/(2 sigma^2)) * exp(-(j-c)^2/(2 sigma^2))
            = taps_h[i] * taps_w[j]   (global scale folded into taps_w)
    """
    center = k_size // 2
    d = np.arange(k_size, dtype=np.float64) - center
    u = np.exp(-np.square(d) / (2.0 * np.square(sigma)))
    scale = 1.0 / (2.0 * np.pi * sigma)
    taps_h = tuple(float(t) for t in u)
    taps_w = tuple(float(t * scale) for t in u)
    return taps_h, taps_w


def _smooth2d_separable(x, taps_h, taps_w):
    """Zero-padded 'same' 5x5 gaussian as two 1-D passes (10 taps).

    Cold path (runs once per batch on a single (H, W) map).  The sublane-
    direction shifts could additionally be routed through the XLU with
    pltpu.roll, but the win is negligible next to the hot-path DMA, so the
    simple slice form is kept for lowering robustness.
    """
    H, W = x.shape
    k = len(taps_h)
    r = k // 2
    # Pass along H (sublanes): zero-pad rows, 1-D MAC.
    zr = jnp.zeros((r, W), x.dtype)
    xp = jnp.concatenate([zr, x, zr], axis=0)        # (H + 2r, W)
    acc = jnp.zeros((H, W), x.dtype)
    for i in range(k):
        acc = acc + jnp.float32(taps_h[i]) * xp[i:i + H, :]
    # Pass along W (lanes): zero-pad cols, 1-D MAC (global scale folded in taps_w).
    zc = jnp.zeros((H, r), x.dtype)
    yp = jnp.concatenate([zc, acc, zc], axis=1)      # (H, W + 2r)
    out = jnp.zeros((H, W), x.dtype)
    for j in range(k):
        out = out + jnp.float32(taps_w[j]) * yp[:, j:j + W]
    return out


# --------------------------------- kernels ----------------------------------

def _weight_kernel(cur_conf_ref, tmp_conf_ref, w_ref, *, taps_h, taps_w, smooth):
    """Per-batch fusion weight for the 'current' stream.

    sigmoid(max_c(conf)) == max_c(sigmoid(conf)) (sigmoid is monotonic), so the
    channel max is taken first: 2*H*W sigmoids per batch instead of 2*Cc*H*W.
    The 2-way softmax collapses to softmax([a, b])[0] == sigmoid(a - b): a
    single EUP op replaces the max / two exps / divide.
    """
    c_cur = jax.nn.sigmoid(jnp.max(cur_conf_ref[0].astype(jnp.float32), axis=0))
    c_tmp = jax.nn.sigmoid(jnp.max(tmp_conf_ref[0].astype(jnp.float32), axis=0))

    if smooth:
        c_cur = _smooth2d_separable(c_cur, taps_h, taps_w)
        c_tmp = _smooth2d_separable(c_tmp, taps_h, taps_w)

    # Emit directly in the BEV dtype: the hot-path kernel never casts and the
    # (B, 1, HW) weight array's HBM footprint/DMA halves for bf16 BEVs.
    w_ref[0] = jax.nn.sigmoid(c_cur - c_tmp).astype(w_ref.dtype)


def _fusion_kernel(w_ref, cur_ref, tmp_ref, out_ref):
    """out = tmp + w * (cur - tmp), lane-dense over the flattened (H*W) axis."""
    w = w_ref[...]        # (1, 1, hw_block), already in the BEV dtype
    cur = cur_ref[...]    # (1, c_block, hw_block)
    tmp = tmp_ref[...]
    out_ref[...] = tmp + w * (cur - tmp)


# ------------------------------- tile planner --------------------------------

def _vmem_capacity_bytes():
    try:
        return int(pltpu.get_tpu_info().vmem_capacity_bytes)
    except Exception:
        return 64 * 2 ** 20   # conservative default: v7x physical per-TC VMEM


def _plan_fusion_tiling(B, C, HW, bev_dtype):
    """Pick how the fusion kernel tiles the flattened (B, C, HW) streams."""
    itemsize = jnp.dtype(bev_dtype).itemsize
    pack = max(8, 32 // itemsize)          # sublane pack: 8 f32 / 16 bf16 / 32 int8
    vmem_cap = _vmem_capacity_bytes()
    budget = int(vmem_cap * 0.45)          # <=45% of capacity (v7x-safe headroom)
    max_blk = 8 * 2 ** 20                  # per-stream block cap: mem-bound lerp is
                                           # at roofline well below this; bigger
                                           # blocks only destroy pipelining depth
    min_inner = 2 if B < 2 else 1          # >=2 inner steps feeds both v7x TCs at B==1
    min_total = 4                          # keep the BlockSpec pipeline busy

    def mk(mode, tc, thw):
        tcp = -(-tc // pack) * pack                    # sublane-padded channel extent
        blk = tc * thw * itemsize                      # useful bytes (HBM traffic)
        vblk = tcp * thw * itemsize                    # VMEM bytes incl. padding
        # cur + tmp + out double-buffered, plus the double-buffered (1,1,thw)
        # weight block whose size-1 sublane pads to 8 (32-bit worst case).
        foot = 6 * vblk + 2 * 8 * thw * 4
        inner = (C // tc) * (HW // thw)
        return dict(mode=mode, tc=tc, thw=thw, blk=blk, foot=foot, inner=inner)

    # Channel tiling candidates: C itself (full dim) or pack-aligned divisors.
    plans = [mk("c", t, HW) for t in
             sorted({C, *[d for d in range(pack, C, pack) if C % d == 0]})]
    # HW-tiling fallback candidates: HW itself or 128-aligned divisors.
    plans += [mk("hw", C, t) for t in
              sorted({HW, *[d for d in range(128, HW, 128) if HW % d == 0]})]

    fitting = [p for p in plans if p["foot"] <= budget and p["blk"] <= max_blk]
    if fitting:
        good = [p for p in fitting
                if p["inner"] >= min_inner and p["inner"] * B >= min_total]
        pool = good if good else fitting
        # Biggest block satisfying the constraints (fewest per-step overheads);
        # prefer channel tiling on ties so the c-invariant weight block is
        # DMA'd only once per batch.
        plan = max(pool, key=lambda p: (p["blk"], p["mode"] == "c"))
    else:
        # Nothing fits the budget: take the smallest expressible working set
        # rather than silently exploding (robustness on v7x's 64 MiB VMEM).
        plan = min(plans, key=lambda p: p["foot"])

    plan["vmem_limit"] = int(min(max(plan["foot"] * 1.5 + 4 * 2 ** 20, 16 * 2 ** 20),
                                 vmem_cap - 16 * 2 ** 20))
    return plan


# --------------------------------- wrapper -----------------------------------

def late_fusion(cur_bev, cur_conf, tmp_bev, tmp_conf, *,
                confidence_threshold=0.5, gaussian_smooth=None):
    del confidence_threshold  # unused in forward(), kept for signature parity
    B, C, H, W = cur_bev.shape
    Cc = cur_conf.shape[1]
    HW = H * W
    vmem_cap = _vmem_capacity_bytes()

    smooth = gaussian_smooth is not None
    if smooth:
        taps_h, taps_w = _gaussian_taps(gaussian_smooth["k_size"],
                                        gaussian_smooth["c_sigma"])
    else:
        taps_h, taps_w = (), ()

    # ---------------- Kernel 1: per-batch weight map (cold path) ----------------
    wkernel = functools.partial(_weight_kernel, taps_h=taps_h, taps_w=taps_w,
                                smooth=smooth)
    conf_db = cur_conf.dtype.itemsize
    bev_db = cur_bev.dtype.itemsize
    # Double-buffered confidence inputs + double-buffered output + f32 temps.
    k1_foot = 4 * Cc * HW * conf_db + 2 * HW * bev_db + 12 * HW * 4
    k1_limit = int(min(max(4 * k1_foot, 32 * 2 ** 20), vmem_cap - 16 * 2 ** 20))
    n_taps = len(taps_h) + len(taps_w)

    w_cur = pl.pallas_call(
        wkernel,
        out_shape=jax.ShapeDtypeStruct((B, H, W), cur_bev.dtype),
        grid_spec=pltpu.PrefetchScalarGridSpec(
            num_scalar_prefetch=0,
            grid=(B,),
            in_specs=[
                pl.BlockSpec((1, Cc, H, W), lambda b: (b, 0, 0, 0)),
                pl.BlockSpec((1, Cc, H, W), lambda b: (b, 0, 0, 0)),
            ],
            out_specs=pl.BlockSpec((1, H, W), lambda b: (b, 0, 0)),
        ),
        compiler_params=pltpu.CompilerParams(
            dimension_semantics=("parallel",),
            vmem_limit_bytes=k1_limit),
        cost_estimate=pl.CostEstimate(
            flops=int(B * HW * (2 * Cc + 4 * n_taps + 2)),
            transcendentals=int(B * HW * 3),
            bytes_accessed=int(B * (2 * Cc * HW * conf_db + HW * bev_db))),
    )(cur_conf, tmp_conf)

    # ---------------- Kernel 2: lane-dense weighted fusion (hot path) -----------
    plan = _plan_fusion_tiling(B, C, HW, cur_bev.dtype)
    tc, thw = plan["tc"], plan["thw"]
    n_inner = (C // tc) * (HW // thw)

    # Flatten spatial dims so the output last dim is lane-dense (free bitcasts).
    cur_f = cur_bev.reshape(B, C, HW)
    tmp_f = tmp_bev.reshape(B, C, HW)
    w_f = w_cur.reshape(B, 1, HW)

    if plan["mode"] == "c":
        # Channel tiling: c is the innermost grid axis and the weight's
        # index_map is c-invariant, so the (sublane-padded) weight block is
        # DMA'd once per batch and reused across all channel steps.  Do NOT
        # reorder the grid to (C//tc, B): that would re-fetch it every step.
        w_block, w_map = (1, 1, HW), (lambda b, i: (b, 0, 0))
        bev_block, bev_map = (1, tc, HW), (lambda b, i: (b, i, 0))
    else:
        # HW tiling fallback (small C / no pack-aligned divisor): each step
        # reads a different lane-slab of the weight; still lane-dense stores.
        w_block, w_map = (1, 1, thw), (lambda b, i: (b, 0, i))
        bev_block, bev_map = (1, C, thw), (lambda b, i: (b, 0, i))

    out = pl.pallas_call(
        _fusion_kernel,
        out_shape=jax.ShapeDtypeStruct((B, C, HW), cur_bev.dtype),
        grid_spec=pltpu.PrefetchScalarGridSpec(
            num_scalar_prefetch=0,
            grid=(B, n_inner),
            in_specs=[
                pl.BlockSpec(w_block, w_map),      # weight
                pl.BlockSpec(bev_block, bev_map),  # current BEV
                pl.BlockSpec(bev_block, bev_map),  # temporal BEV
            ],
            out_specs=pl.BlockSpec(bev_block, bev_map),
        ),
        compiler_params=pltpu.CompilerParams(
            dimension_semantics=("parallel", "parallel"),
            vmem_limit_bytes=plan["vmem_limit"]),
        cost_estimate=pl.CostEstimate(
            flops=int(3 * B * C * HW),
            transcendentals=0,
            bytes_accessed=int(B * (3 * C * HW * bev_db + HW * bev_db))),
    )(w_f, cur_f, tmp_f)

    # TODO(synk): when the caller donates cur_bev, input_output_aliases={1: 0}
    # would drop one full-size HBM allocation; not applied here because typical
    # callers (and this test) still read cur_bev afterwards.
    return out.reshape(B, C, H, W)


# -------------------------------- reference ----------------------------------

def _reference(cur_bev, cur_conf, tmp_bev, tmp_conf, gaussian_smooth):
    """Pure-JAX reference mirroring the PyTorch forward (direct 25-tap conv)."""
    kern = _gen_gaussian_kernel(gaussian_smooth["k_size"],
                                gaussian_smooth["c_sigma"])
    r = kern.shape[0] // 2

    def smooth(x):  # x: (B, H, W)
        xp = jnp.pad(x, ((0, 0), (r, r), (r, r)))
        H, W = x.shape[1], x.shape[2]
        acc = jnp.zeros_like(x)
        for i in range(kern.shape[0]):
            for j in range(kern.shape[1]):
                acc = acc + float(kern[i, j]) * xp[:, i:i + H, j:j + W]
        return acc

    c_cur = smooth(jnp.max(jax.nn.sigmoid(cur_conf), axis=1))
    c_tmp = smooth(jnp.max(jax.nn.sigmoid(tmp_conf), axis=1))
    both = jnp.stack([c_cur, c_tmp], axis=1)          # (B, 2, H, W)
    w = jax.nn.softmax(both, axis=1)
    return cur_bev * w[:, 0:1] + tmp_bev * w[:, 1:2]


if __name__ == "__main__":
    B, C, Cc, H, W = 2, 4, 2, 16, 16
    key = jax.random.PRNGKey(0)
    k1, k2, k3, k4 = jax.random.split(key, 4)
    cur_bev = jax.random.normal(k1, (B, C, H, W), dtype=jnp.float32)
    tmp_bev = jax.random.normal(k2, (B, C, H, W), dtype=jnp.float32)
    cur_conf = jax.random.normal(k3, (B, Cc, H, W), dtype=jnp.float32)
    tmp_conf = jax.random.normal(k4, (B, Cc, H, W), dtype=jnp.float32)

    gaussian_smooth = {"k_size": 5, "c_sigma": 1.0}

    out = late_fusion(cur_bev, cur_conf, tmp_bev, tmp_conf,
                      confidence_threshold=0.5,
                      gaussian_smooth=gaussian_smooth)
    out = jax.block_until_ready(out)

    ref = _reference(cur_bev, cur_conf, tmp_bev, tmp_conf, gaussian_smooth)
    np.testing.assert_allclose(np.asarray(out), np.asarray(ref),
                               rtol=1e-4, atol=1e-5)
    print("KERNEL_OK")
</pallas_src>

<mosaic_0001>
module attributes {stable_mosaic.version = 11 : i64} {
  func.func @_weight_kernel(%arg0: i32, %arg1: memref<1x2x16x16xf32, #tpu.memory_space<vmem>>, %arg2: memref<1x2x16x16xf32, #tpu.memory_space<vmem>>, %arg3: memref<1x16x16xf32, #tpu.memory_space<vmem>>) attributes {dimension_semantics = [#tpu.dimension_semantics<parallel>], iteration_bounds = array<i64: 2>, scalar_prefetch = 0 : i64, scratch_operands = 0 : i64, tpu.core_type = #tpu.core_type<tc>, window_params = [{transform_indices = @transform_0, window_bounds = array<i64: 1, 2, 16, 16>}, {transform_indices = @transform_1, window_bounds = array<i64: 1, 2, 16, 16>}, {transform_indices = @transform_2, window_bounds = array<i64: 1, 16, 16>}]} {
    %c0 = arith.constant 0 : index
    %c0_0 = arith.constant 0 : index
    %c0_1 = arith.constant 0 : index
    %c0_2 = arith.constant 0 : index
    %0 = vector.load %arg1[%c0, %c0_0, %c0_1, %c0_2] : memref<1x2x16x16xf32, #tpu.memory_space<vmem>>, vector<1x2x16x16xf32>
    %1 = vector.shape_cast %0 : vector<1x2x16x16xf32> to vector<2x16x16xf32>
    %cst = arith.constant dense<0xFF800000> : vector<16x16xf32>
    %2 = vector.multi_reduction <maximumf>, %1, %cst [0] : vector<2x16x16xf32> to vector<16x16xf32>
    %3 = arith.negf %2 : vector<16x16xf32>
    %4 = math.exp %3 : vector<16x16xf32>
    %cst_3 = arith.constant 1.000000e+00 : f32
    %5 = vector.broadcast %cst_3 : f32 to vector<16x16xf32>
    %6 = arith.addf %5, %4 : vector<16x16xf32>
    %7 = arith.divf %5, %6 : vector<16x16xf32>
    %c0_4 = arith.constant 0 : index
    %c0_5 = arith.constant 0 : index
    %c0_6 = arith.constant 0 : index
    %c0_7 = arith.constant 0 : index
    %8 = vector.load %arg2[%c0_4, %c0_5, %c0_6, %c0_7] : memref<1x2x16x16xf32, #tpu.memory_space<vmem>>, vector<1x2x16x16xf32>
    %9 = vector.shape_cast %8 : vector<1x2x16x16xf32> to vector<2x16x16xf32>
    %cst_8 = arith.constant dense<0xFF800000> : vector<16x16xf32>
    %10 = vector.multi_reduction <maximumf>, %9, %cst_8 [0] : vector<2x16x16xf32> to vector<16x16xf32>
    %11 = arith.negf %10 : vector<16x16xf32>
    %12 = math.exp %11 : vector<16x16xf32>
    %cst_9 = arith.constant 1.000000e+00 : f32
    %13 = vector.broadcast %cst_9 : f32 to vector<16x16xf32>
    %14 = arith.addf %13, %12 : vector<16x16xf32>
    %15 = arith.divf %13, %14 : vector<16x16xf32>
    %cst_10 = arith.constant 0.000000e+00 : f32
    %16 = vector.broadcast %cst_10 : f32 to vector<2x16xf32>
    %17 = tpu.concatenate %16, %7, %16 in 0 : vector<2x16xf32>, vector<16x16xf32>, vector<2x16xf32> -> vector<20x16xf32>
    %cst_11 = arith.constant 0.000000e+00 : f32
    %18 = vector.broadcast %cst_11 : f32 to vector<16x16xf32>
    %19 = vector.extract_strided_slice %17 {offsets = [0, 0], sizes = [16, 16], strides = [1, 1]} : vector<20x16xf32> to vector<16x16xf32>
    %cst_12 = arith.constant 0.135335281 : f32
    %20 = vector.broadcast %cst_12 : f32 to vector<16x16xf32>
    %21 = arith.mulf %20, %19 : vector<16x16xf32>
    %22 = arith.addf %18, %21 : vector<16x16xf32>
    %23 = vector.extract_strided_slice %17 {offsets = [1, 0], sizes = [16, 16], strides = [1, 1]} : vector<20x16xf32> to vector<16x16xf32>
    %cst_13 = arith.constant 0.606530666 : f32
    %24 = vector.broadcast %cst_13 : f32 to vector<16x16xf32>
    %25 = arith.mulf %24, %23 : vector<16x16xf32>
    %26 = arith.addf %22, %25 : vector<16x16xf32>
    %27 = vector.extract_strided_slice %17 {offsets = [2, 0], sizes = [16, 16], strides = [1, 1]} : vector<20x16xf32> to vector<16x16xf32>
    %cst_14 = arith.constant 1.000000e+00 : f32
    %28 = vector.broadcast %cst_14 : f32 to vector<16x16xf32>
    %29 = arith.mulf %28, %27 : vector<16x16xf32>
    %30 = arith.addf %26, %29 : vector<16x16xf32>
    %31 = vector.extract_strided_slice %17 {offsets = [3, 0], sizes = [16, 16], strides = [1, 1]} : vector<20x16xf32> to vector<16x16xf32>
    %cst_15 = arith.constant 0.606530666 : f32
    %32 = vector.broadcast %cst_15 : f32 to vector<16x16xf32>
    %33 = arith.mulf %32, %31 : vector<16x16xf32>
    %34 = arith.addf %30, %33 : vector<16x16xf32>
    %35 = vector.extract_strided_slice %17 {offsets = [4, 0], sizes = [16, 16], strides = [1, 1]} : vector<20x16xf32> to vector<16x16xf32>
    %cst_16 = arith.constant 0.135335281 : f32
    %36 = vector.broadcast %cst_16 : f32 to vector<16x16xf32>
    %37 = arith.mulf %36, %35 : vector<16x16xf32>
    %38 = arith.addf %34, %37 : vector<16x16xf32>
    %cst_17 = arith.constant 0.000000e+00 : f32
    %39 = vector.broadcast %cst_17 : f32 to vector<16x2xf32>
    %40 = tpu.concatenate %39, %38, %39 in 1 : vector<16x2xf32>, vector<16x16xf32>, vector<16x2xf32> -> vector<16x20xf32>
    %cst_18 = arith.constant 0.000000e+00 : f32
    %41 = vector.broadcast %cst_18 : f32 to vector<16x16xf32>
    %42 = vector.extract_strided_slice %40 {offsets = [0, 0], sizes = [16, 16], strides = [1, 1]} : vector<16x20xf32> to vector<16x16xf32>
    %cst_19 = arith.constant 0.0215392802 : f32
    %43 = vector.broadcast %cst_19 : f32 to vector<16x16xf32>
    %44 = arith.mulf %43, %42 : vector<16x16xf32>
    %45 = arith.addf %41, %44 : vector<16x16xf32>
    %46 = vector.extract_strided_slice %40 {offsets = [0, 1], sizes = [16, 16], strides = [1, 1]} : vector<16x20xf32> to vector<16x16xf32>
    %cst_20 = arith.constant 0.0965323522 : f32
    %47 = vector.broadcast %cst_20 : f32 to vector<16x16xf32>
    %48 = arith.mulf %47, %46 : vector<16x16xf32>
    %49 = arith.addf %45, %48 : vector<16x16xf32>
    %50 = vector.extract_strided_slice %40 {offsets = [0, 2], sizes = [16, 16], strides = [1, 1]} : vector<16x20xf32> to vector<16x16xf32>
    %cst_21 = arith.constant 0.159154937 : f32
    %51 = vector.broadcast %cst_21 : f32 to vector<16x16xf32>
    %52 = arith.mulf %51, %50 : vector<16x16xf32>
    %53 = arith.addf %49, %52 : vector<16x16xf32>
    %54 = vector.extract_strided_slice %40 {offsets = [0, 3], sizes = [16, 16], strides = [1, 1]} : vector<16x20xf32> to vector<16x16xf32>
    %cst_22 = arith.constant 0.0965323522 : f32
    %55 = vector.broadcast %cst_22 : f32 to vector<16x16xf32>
    %56 = arith.mulf %55, %54 : vector<16x16xf32>
    %57 = arith.addf %53, %56 : vector<16x16xf32>
    %58 = vector.extract_strided_slice %40 {offsets = [0, 4], sizes = [16, 16], strides = [1, 1]} : vector<16x20xf32> to vector<16x16xf32>
    %cst_23 = arith.constant 0.0215392802 : f32
    %59 = vector.broadcast %cst_23 : f32 to vector<16x16xf32>
    %60 = arith.mulf %59, %58 : vector<16x16xf32>
    %61 = arith.addf %57, %60 : vector<16x16xf32>
    %cst_24 = arith.constant 0.000000e+00 : f32
    %62 = vector.broadcast %cst_24 : f32 to vector<2x16xf32>
    %63 = tpu.concatenate %62, %15, %62 in 0 : vector<2x16xf32>, vector<16x16xf32>, vector<2x16xf32> -> vector<20x16xf32>
    %cst_25 = arith.constant 0.000000e+00 : f32
    %64 = vector.broadcast %cst_25 : f32 to vector<16x16xf32>
    %65 = vector.extract_strided_slice %63 {offsets = [0, 0], sizes = [16, 16], strides = [1, 1]} : vector<20x16xf32> to vector<16x16xf32>
    %cst_26 = arith.constant 0.135335281 : f32
    %66 = vector.broadcast %cst_26 : f32 to vector<16x16xf32>
    %67 = arith.mulf %66, %65 : vector<16x16xf32>
    %68 = arith.addf %64, %67 : vector<16x16xf32>
    %69 = vector.extract_strided_slice %63 {offsets = [1, 0], sizes = [16, 16], strides = [1, 1]} : vector<20x16xf32> to vector<16x16xf32>
    %cst_27 = arith.constant 0.606530666 : f32
    %70 = vector.broadcast %cst_27 : f32 to vector<16x16xf32>
    %71 = arith.mulf %70, %69 : vector<16x16xf32>
    %72 = arith.addf %68, %71 : vector<16x16xf32>
    %73 = vector.extract_strided_slice %63 {offsets = [2, 0], sizes = [16, 16], strides = [1, 1]} : vector<20x16xf32> to vector<16x16xf32>
    %cst_28 = arith.constant 1.000000e+00 : f32
    %74 = vector.broadcast %cst_28 : f32 to vector<16x16xf32>
    %75 = arith.mulf %74, %73 : vector<16x16xf32>
    %76 = arith.addf %72, %75 : vector<16x16xf32>
    %77 = vector.extract_strided_slice %63 {offsets = [3, 0], sizes = [16, 16], strides = [1, 1]} : vector<20x16xf32> to vector<16x16xf32>
    %cst_29 = arith.constant 0.606530666 : f32
    %78 = vector.broadcast %cst_29 : f32 to vector<16x16xf32>
    %79 = arith.mulf %78, %77 : vector<16x16xf32>
    %80 = arith.addf %76, %79 : vector<16x16xf32>
    %81 = vector.extract_strided_slice %63 {offsets = [4, 0], sizes = [16, 16], strides = [1, 1]} : vector<20x16xf32> to vector<16x16xf32>
    %cst_30 = arith.constant 0.135335281 : f32
    %82 = vector.broadcast %cst_30 : f32 to vector<16x16xf32>
    %83 = arith.mulf %82, %81 : vector<16x16xf32>
    %84 = arith.addf %80, %83 : vector<16x16xf32>
    %cst_31 = arith.constant 0.000000e+00 : f32
    %85 = vector.broadcast %cst_31 : f32 to vector<16x2xf32>
    %86 = tpu.concatenate %85, %84, %85 in 1 : vector<16x2xf32>, vector<16x16xf32>, vector<16x2xf32> -> vector<16x20xf32>
    %cst_32 = arith.constant 0.000000e+00 : f32
    %87 = vector.broadcast %cst_32 : f32 to vector<16x16xf32>
    %88 = vector.extract_strided_slice %86 {offsets = [0, 0], sizes = [16, 16], strides = [1, 1]} : vector<16x20xf32> to vector<16x16xf32>
    %cst_33 = arith.constant 0.0215392802 : f32
    %89 = vector.broadcast %cst_33 : f32 to vector<16x16xf32>
    %90 = arith.mulf %89, %88 : vector<16x16xf32>
    %91 = arith.addf %87, %90 : vector<16x16xf32>
    %92 = vector.extract_strided_slice %86 {offsets = [0, 1], sizes = [16, 16], strides = [1, 1]} : vector<16x20xf32> to vector<16x16xf32>
    %cst_34 = arith.constant 0.0965323522 : f32
    %93 = vector.broadcast %cst_34 : f32 to vector<16x16xf32>
    %94 = arith.mulf %93, %92 : vector<16x16xf32>
    %95 = arith.addf %91, %94 : vector<16x16xf32>
    %96 = vector.extract_strided_slice %86 {offsets = [0, 2], sizes = [16, 16], strides = [1, 1]} : vector<16x20xf32> to vector<16x16xf32>
    %cst_35 = arith.constant 0.159154937 : f32
    %97 = vector.broadcast %cst_35 : f32 to vector<16x16xf32>
    %98 = arith.mulf %97, %96 : vector<16x16xf32>
    %99 = arith.addf %95, %98 : vector<16x16xf32>
    %100 = vector.extract_strided_slice %86 {offsets = [0, 3], sizes = [16, 16], strides = [1, 1]} : vector<16x20xf32> to vector<16x16xf32>
    %cst_36 = arith.constant 0.0965323522 : f32
    %101 = vector.broadcast %cst_36 : f32 to vector<16x16xf32>
    %102 = arith.mulf %101, %100 : vector<16x16xf32>
    %103 = arith.addf %99, %102 : vector<16x16xf32>
    %104 = vector.extract_strided_slice %86 {offsets = [0, 4], sizes = [16, 16], strides = [1, 1]} : vector<16x20xf32> to vector<16x16xf32>
    %cst_37 = arith.constant 0.0215392802 : f32
    %105 = vector.broadcast %cst_37 : f32 to vector<16x16xf32>
    %106 = arith.mulf %105, %104 : vector<16x16xf32>
    %107 = arith.addf %103, %106 : vector<16x16xf32>
    %108 = arith.subf %61, %107 : vector<16x16xf32>
    %109 = arith.negf %108 : vector<16x16xf32>
    %110 = math.exp %109 : vector<16x16xf32>
    %cst_38 = arith.constant 1.000000e+00 : f32
    %111 = vector.broadcast %cst_38 : f32 to vector<16x16xf32>
    %112 = arith.addf %111, %110 : vector<16x16xf32>
    %113 = arith.divf %111, %112 : vector<16x16xf32>
    %c0_39 = arith.constant 0 : index
    %c0_40 = arith.constant 0 : index
    %c0_41 = arith.constant 0 : index
    %114 = vector.load %arg3[%c0_39, %c0_40, %c0_41] : memref<1x16x16xf32, #tpu.memory_space<vmem>>, vector<1x16x16xf32>
    %115 = vector.shape_cast %114 : vector<1x16x16xf32> to vector<16x16xf32>
    %116 = vector.shape_cast %113 : vector<16x16xf32> to vector<1x16x16xf32>
    tpu.vector_store %arg3[%c0_39, %c0_40, %c0_41], %116 {strides = array<i32>} : memref<1x16x16xf32, #tpu.memory_space<vmem>>, vector<1x16x16xf32>,
    return
  }
  func.func @transform_0(%arg0: i32) -> (i32, i32, i32, i32) {
    %c0_i32 = arith.constant 0 : i32
    %c0_i32_0 = arith.constant 0 : i32
    %c0_i32_1 = arith.constant 0 : i32
    %c0_i32_2 = arith.constant 0 : i32
    return %arg0, %c0_i32, %c0_i32_0, %c0_i32_1 : i32, i32, i32, i32
  }
  func.func @transform_1(%arg0: i32) -> (i32, i32, i32, i32) {
    %c0_i32 = arith.constant 0 : i32
    %c0_i32_0 = arith.constant 0 : i32
    %c0_i32_1 = arith.constant 0 : i32
    %c0_i32_2 = arith.constant 0 : i32
    return %arg0, %c0_i32, %c0_i32_0, %c0_i32_1 : i32, i32, i32, i32
  }
  func.func @transform_2(%arg0: i32) -> (i32, i32, i32) {
    %c0_i32 = arith.constant 0 : i32
    %c0_i32_0 = arith.constant 0 : i32
    %c0_i32_1 = arith.constant 0 : i32
    return %arg0, %c0_i32, %c0_i32_0 : i32, i32, i32
  }
}

</mosaic_0001>

<llo_original>
// kernel: tpu_custom_call.1
$region0: #{tpu_custom_call.1}
  #allocation0 [shape = 'u32[]', space=smem, size = 0x4, offset = 0x4, fixed_abs, tag = 'smem constant byte address 0x4 - core index']
  #allocation1 [shape = 'u32[144,128]{1,0:T(1,128)}', space=vmem, size = 0x12000, scoped, tag = 'internal scratch']
  %s0 = inlined_call_operand.hbm [shape: f32[2,2,16,16], index: 0, kind: input, shape index: {}]
  %s1 = inlined_call_operand.hbm [shape: f32[2,2,16,16], index: 1, kind: input, shape index: {}]
  %s2 = inlined_call_operand.hbm [shape: f32[2,16,16], index: 2, kind: output, shape index: {}]
  %s3 = sld [smem:[#allocation0]]
  $region49: #{tpu_custom_call.1} parent=0
    _
  %s5 = ssub.s32 1, %s3
  %s6 = scalar_select 0, %s5, %s3
  $region1: #{tpu_custom_call.1} parent=0
    #allocation2 [shape = 'u8[32768]{0}', space=vmem, size = 0x8000, scoped, tag = 'input window, operand 0']
    #allocation3 [shape = 's32[2]{0}', space=sflag, size = 0x8, scoped, tag = 'scoped memory for tpu_custom_call.1']
    #allocation4 [shape = 's32[2]{0}', space=sflag, size = 0x8, scoped, tag = 'scoped memory for tpu_custom_call.1']
    #allocation5 [shape = 'u8[32768]{0}', space=vmem, size = 0x8000, scoped, tag = 'input window, operand 1']
    #allocation6 [shape = 's32[2]{0}', space=sflag, size = 0x8, scoped, tag = 'scoped memory for tpu_custom_call.1']
    #allocation7 [shape = 'u8[16384]{0}', space=vmem, size = 0x4000, scoped, tag = 'output window, operand 0']
    %7 = vsyncpa [#allocation3], 0
    %s8 = scalar_lea.sflag [#allocation3], 1
    %9 = vsyncpa %s8, 0
    %10 = vsyncpa [#allocation6], 0
    %s11 = scalar_lea.sflag [#allocation6], 1
    %12 = vsyncpa %s11, 0
    %13 = vsyncpa [#allocation4], 0
    %s14 = scalar_lea.sflag [#allocation4], 1
    %15 = vsyncpa %s14, 0
    loop: start=0, step=1, limit=4
    $region2: #{tpu_custom_call.1} parent=1 // loop_pre_header
      _
    $region3: #{tpu_custom_call.1} parent=1 // loop_header
      %s17 = sphi 0, %s21
      %p18 = scmp.ge.s32.totalorder %s17, 4
      %s27 = sphi 0, %s29
      %s30 = sphi 0, %s27
      %s31 = sphi 0, %s30
      %s47 = sphi 0, %s31
      %s53 = sphi 0, %s55
      %s56 = sphi 0, %s53
      %s57 = sphi 0, %s56
      %s73 = sphi 0, %s57
      %s79 = sphi 0, %s81
      %s82 = sphi 0, %s79
      %s83 = sphi 0, %s82
      %s99 = sphi 0, %s83
    $region4: #{tpu_custom_call.1} parent=1 // loop_header_branch
      %20 = sbr.rel (%p18) target = $region8
    $region5: #{tpu_custom_call.1} parent=1 // loop_body
      %s22 = ssub.s32 %s17, 1
      %s23 = ssub.s32 %s17, 2
      %s24 = sadd.s32 %s17, 1
      %s25 = ssub.s32 %s17, %s24
      %p26 = scmp.eq.s32.totalorder %s25, 0
      %s28 = sadd.s32 %s27, 1
      %s29 = scalar_select %p26, %s27, %s28
      %p32 = pneg %p26
      %p33 = scmp.eq.s32.totalorder %s17, 1
      %p34 = por %p32, %p33
      %p35 = scmp.ne.s32.totalorder %s27, %s30
      %p36 = scmp.eq.s32.totalorder %s17, 0
      %p37 = por %p35, %p36
      %p38 = scmp.ne.s32.totalorder %s27, %s30
      %p39 = scmp.eq.s32.totalorder %s22, 1
      %p40 = por %p38, %p39
      %p41 = scmp.ne.s32.totalorder %s30, %s31
      %p42 = scmp.eq.s32.totalorder %s22, 0
      %p43 = por %p41, %p42
      %p44 = scmp.ne.s32.totalorder %s30, %s31
      %p45 = scmp.eq.s32.totalorder %s23, 1
      %p46 = por %p44, %p45
      %p48 = scmp.ne.s32.totalorder %s31, %s47
      %p49 = scmp.eq.s32.totalorder %s23, 0
      %p50 = por %p48, %p49
      %s51 = ssub.s32 %s17, %s24
      %p52 = scmp.eq.s32.totalorder %s51, 0
      %s54 = sadd.s32 %s53, 1
      %s55 = scalar_select %p52, %s53, %s54
      %p58 = pneg %p52
      %p59 = scmp.eq.s32.totalorder %s17, 1
      %p60 = por %p58, %p59
      %p61 = scmp.ne.s32.totalorder %s53, %s56
      %p62 = scmp.eq.s32.totalorder %s17, 0
      %p63 = por %p61, %p62
      %p64 = scmp.ne.s32.totalorder %s53, %s56
      %p65 = scmp.eq.s32.totalorder %s22, 1
      %p66 = por %p64, %p65
      %p67 = scmp.ne.s32.totalorder %s56, %s57
      %p68 = scmp.eq.s32.totalorder %s22, 0
      %p69 = por %p67, %p68
      %p70 = scmp.ne.s32.totalorder %s56, %s57
      %p71 = scmp.eq.s32.totalorder %s23, 1
      %p72 = por %p70, %p71
      %p74 = scmp.ne.s32.totalorder %s57, %s73
      %p75 = scmp.eq.s32.totalorder %s23, 0
      %p76 = por %p74, %p75
      %s77 = ssub.s32 %s17, %s24
      %p78 = scmp.eq.s32.totalorder %s77, 0
      %s80 = sadd.s32 %s79, 1
      %s81 = scalar_select %p78, %s79, %s80
      %p84 = pneg %p78
      %p85 = scmp.eq.s32.totalorder %s17, 1
      %p86 = por %p84, %p85
      %p87 = scmp.ne.s32.totalorder %s79, %s82
      %p88 = scmp.eq.s32.totalorder %s17, 0
      %p89 = por %p87, %p88
      %p90 = scmp.ne.s32.totalorder %s79, %s82
      %p91 = scmp.eq.s32.totalorder %s22, 1
      %p92 = por %p90, %p91
      %p93 = scmp.ne.s32.totalorder %s82, %s83
      %p94 = scmp.eq.s32.totalorder %s22, 0
      %p95 = por %p93, %p94
      %p96 = scmp.ne.s32.totalorder %s82, %s83
      %p97 = scmp.eq.s32.totalorder %s23, 1
      %p98 = por %p96, %p97
      %p100 = scmp.ne.s32.totalorder %s83, %s99
      %p101 = scmp.eq.s32.totalorder %s23, 0
      %p102 = por %p100, %p101
      %p103 = scmp.le.s32.totalorder 1, %s17
      %p104 = scmp.lt.s32.totalorder %s17, 3
      %p105 = pnand %p103, %p104
      %p106 = pneg %p105
      // Predicated region
      $region9: #{tpu_custom_call.1} parent=5 // pred_check
        _
      $region10: #{tpu_custom_call.1} parent=5 // pred_check_branch
        %108 = sbr.rel (%p105) target = $region12
      $region11: #{tpu_custom_call.1} parent=5 // pred_region
        %s109 = ssub.s32 %s17, 1
      $region12: #{tpu_custom_call.1} parent=5 // pred_fallthru
        _
      %p110 = scmp.lt.s32.totalorder %s17, 2
      // Predicated region
      $region13: #{tpu_custom_call.1} parent=5 // pred_check
        %p111 = pneg %p110
      $region14: #{tpu_custom_call.1} parent=5 // pred_check_branch
        %113 = sbr.rel (%p111) target = $region16
      $region15: #{tpu_custom_call.1} parent=5 // pred_region
        // Predicated region
        $region17: #{tpu_custom_call.1} parent=15 // pred_check
          %p114 = pneg %p37
        $region18: #{tpu_custom_call.1} parent=15 // pred_check_branch
          %116 = sbr.rel (%p114) target = $region20
        $region19: #{tpu_custom_call.1} parent=15 // pred_region
          %s117 = sand.u32 %s27, 1
          %s118 = scalar_lea.sflag [#allocation3], %s117
          %s119 = sand.u32 %s27, 1
          %s120 = smul.addr %s119, 32
          %s121 = scalar_lea.vmem [#allocation2], %s120
          %s123 = ssub.s32 512, 512
          %124 = vsyncadd %s118, %s123
          %s125 = smul.addr %s17, 4
          %s126 = smul.addr %s125, 128
          %s127 = scalar_lea.hbm %s0, %s126
          %s128 = sshll.u32 %s121, 4
          %s129 = int_to_ptr.vmem [resolvable:$true] %s128
          %134 = dma.hbm_to_vmem [thread:$0]  %s127, 512, %s129, %s118, 128, 128, 8
        $region20: #{tpu_custom_call.1} parent=15 // pred_fallthru
          _
        // Predicated region
        $region21: #{tpu_custom_call.1} parent=15 // pred_check
          %p135 = pneg %p63
        $region22: #{tpu_custom_call.1} parent=15 // pred_check_branch
          %137 = sbr.rel (%p135) target = $region24
        $region23: #{tpu_custom_call.1} parent=15 // pred_region
          %s138 = sand.u32 %s53, 1
          %s139 = scalar_lea.sflag [#allocation6], %s138
          %s140 = sand.u32 %s53, 1
          %s141 = smul.addr %s140, 32
          %s142 = scalar_lea.vmem [#allocation5], %s141
          %s144 = ssub.s32 512, 512
          %145 = vsyncadd %s139, %s144
          %s146 = smul.addr %s17, 4
          %s147 = smul.addr %s146, 128
          %s148 = scalar_lea.hbm %s1, %s147
          %s149 = sshll.u32 %s142, 4
          %s150 = int_to_ptr.vmem [resolvable:$true] %s149
          %155 = dma.hbm_to_vmem [thread:$0]  %s148, 512, %s150, %s139, 128, 128, 8
        $region24: #{tpu_custom_call.1} parent=15 // pred_fallthru
          _
      $region16: #{tpu_custom_call.1} parent=5 // pred_fallthru
        _
      %p156 = scmp.le.s32.totalorder 1, %s17
      %p157 = scmp.lt.s32.totalorder %s17, 3
      %p158 = pnand %p156, %p157
      %p159 = pneg %p158
      // Predicated region
      $region25: #{tpu_custom_call.1} parent=5 // pred_check
        _
      $region26: #{tpu_custom_call.1} parent=5 // pred_check_branch
        %161 = sbr.rel (%p158) target = $region28
      $region27: #{tpu_custom_call.1} parent=5 // pred_region
        %s162 = ssub.s32 %s17, 1
        %s163 = sand.u32 %s30, 1
        %s164 = scalar_lea.sflag [#allocation3], %s163
        %s165 = sand.u32 %s30, 1
        %s166 = smul.addr %s165, 32
        %s167 = scalar_lea.vmem [#allocation2], %s166
        // Predicated region
        $region29: #{tpu_custom_call.1} parent=27 // pred_check
          %p168 = pneg %p43
        $region30: #{tpu_custom_call.1} parent=27 // pred_check_branch
          %170 = sbr.rel (%p168) target = $region32
        $region31: #{tpu_custom_call.1} parent=27 // pred_region
          %171 = dma.done %s164, 512
        $region32: #{tpu_custom_call.1} parent=27 // pred_fallthru
          _
        %s172 = sand.u32 %s56, 1
        %s173 = scalar_lea.sflag [#allocation6], %s172
        %s174 = sand.u32 %s56, 1
        %s175 = smul.addr %s174, 32
        %s176 = scalar_lea.vmem [#allocation5], %s175
        // Predicated region
        $region33: #{tpu_custom_call.1} parent=27 // pred_check
          %p177 = pneg %p69
        $region34: #{tpu_custom_call.1} parent=27 // pred_check_branch
          %179 = sbr.rel (%p177) target = $region36
        $region35: #{tpu_custom_call.1} parent=27 // pred_region
          %180 = dma.done %s173, 512
        $region36: #{tpu_custom_call.1} parent=27 // pred_fallthru
          _
        %s181 = sand.u32 %s30, 1
        %s182 = scalar_lea.sflag [#allocation3], %s181
        %s183 = sand.u32 %s30, 1
        %s184 = smul.addr %s183, 32
        %s185 = scalar_lea.vmem [#allocation2], %s184
        %p186 = pneg %p43
        %p187 = pneg %p40
        %s188 = sand.u32 %s56, 1
        %s189 = scalar_lea.sflag [#allocation6], %s188
        %s190 = sand.u32 %s56, 1
        %s191 = smul.addr %s190, 32
        %s192 = scalar_lea.vmem [#allocation5], %s191
        %p193 = pneg %p69
        %p194 = pneg %p66
        %p195 = pneg %p95
        %p196 = pneg %p92
        %s197 = sand.u32 %s82, 1
        %s198 = scalar_lea.sflag [#allocation4], %s197
        %s199 = sand.u32 %s82, 1
        %s200 = smul.addr %s199, 16
        %s201 = scalar_lea.vmem [#allocation7], %s200
        %v202 = vld [vmem:[%s167] sm:$0xff]
        %v203 = vld [vmem:[%s167 + $0x8] sm:$0xff]
        %v204 = vld [vmem:[%s167 + $0x10] sm:$0xff]
        %v205 = vld [vmem:[%s167 + $0x18] sm:$0xff]
        %vm206 = vcmask 130048
        %v207 = vsel %vm206, %v202, -inf
        %v208 = vsel %vm206, %v204, -inf
        %v209 = vmax.f32 %v207, %v208
        %v210 = vsel %vm206, %v203, -inf
        %v211 = vsel %vm206, %v205, -inf
        %v212 = vmax.f32 %v210, %v211
        %v213 = vxor.u32 %v209, 2147483648
        %v214 = vxor.u32 %v212, 2147483648
        %v215 = vmul.f32 %v213, 1.442695
        %v216 = vpow.pop %v215
        %v217 = vmul.f32 %v214, 1.442695
        %v218 = vpow.pop %v217
        %v219 = vadd.f32 %v216, 1.0
        %v220 = vadd.f32 %v218, 1.0
        %v221 = vrcp.pop %v219
        %v222 = vmul.f32 1.0, %v221
        %v223 = vrcp.pop %v220
        %v224 = vmul.f32 1.0, %v223
        %v225 = vld [vmem:[%s176] sm:$0xff]
        %v226 = vld [vmem:[%s176 + $0x8] sm:$0xff]
        %v227 = vld [vmem:[%s176 + $0x10] sm:$0xff]
        %v228 = vld [vmem:[%s176 + $0x18] sm:$0xff]
        %v229 = vsel %vm206, %v225, -inf
        %v230 = vsel %vm206, %v227, -inf
        %v231 = vmax.f32 %v229, %v230
        %v232 = vsel %vm206, %v226, -inf
        %v233 = vsel %vm206, %v228, -inf
        %v234 = vmax.f32 %v232, %v233
        %v235 = vxor.u32 %v231, 2147483648
        %v236 = vxor.u32 %v234, 2147483648
        %v237 = vmul.f32 %v235, 1.442695
        %v238 = vpow.pop %v237
        %v239 = vmul.f32 %v236, 1.442695
        %v240 = vpow.pop %v239
        %v241 = vadd.f32 %v238, 1.0
        %v242 = vadd.f32 %v240, 1.0
        %v243 = vrcp.pop %v241
        %v244 = vmul.f32 1.0, %v243
        %v245 = vrcp.pop %v242
        %v246 = vmul.f32 1.0, %v245
        %vm249 = vcmask 1041408
        %v250 = vrot.slane %v222, 6
        %v251 = vrot.slane %v224, 6
        %v252 = vsel %vm249, %v250, %v251
        %v256 = vsel %vm249, 0.0, %v250
        %v257 = vsel %vm249, %v251, 0.0
        %v258 = vmul.f32 %v256, 0.13533528
        %v259 = vmul.f32 %v252, 0.13533528
        %v260 = vadd.f32 %v258, 0.0
        %v261 = vadd.f32 %v259, 0.0
        %v262 = vmul.f32 %v256, 0.60653067
        %v263 = vmul.f32 %v252, 0.60653067
        %v264 = vmul.f32 %v257, 0.60653067
        %vm268 = vcmask 1046528
        %v269 = vrot.slane %v262, 1
        %v270 = vrot.slane %v263, 1
        %v271 = vsel %vm268, %v269, %v270
        %v272 = vrot.slane %v264, 1
        %v273 = vsel %vm268, %v270, %v272
        %v276 = vadd.f32 %v260, %v271
        %v277 = vadd.f32 %v261, %v273
        %vm280 = vcmask 1045504
        %v281 = vrot.slane %v256, 2
        %v282 = vrot.slane %v252, 2
        %v283 = vsel %vm280, %v281, %v282
        %v284 = vrot.slane %v257, 2
        %v285 = vsel %vm280, %v282, %v284
        %v288 = vadd.f32 %v276, %v283
        %v289 = vadd.f32 %v277, %v285
        %vm290 = vcmask 1044480
        %v291 = vrot.slane %v262, 3
        %v292 = vrot.slane %v263, 3
        %v293 = vsel %vm290, %v291, %v292
        %v294 = vrot.slane %v264, 3
        %v295 = vsel %vm290, %v292, %v294
        %v298 = vadd.f32 %v288, %v293
        %v299 = vadd.f32 %v289, %v295
        %v300 = vmul.f32 %v257, 0.13533528
        %vm304 = vcmask 1043456
        %v305 = vrot.slane %v258, 4
        %v306 = vrot.slane %v259, 4
        %v307 = vsel %vm304, %v305, %v306
        %v308 = vrot.slane %v300, 4
        %v309 = vsel %vm304, %v306, %v308
        %v312 = vadd.f32 %v298, %v307
        %v313 = vadd.f32 %v299, %v309
        %316 = vrot.lane.b32.xlu0 %v312, 2
        %v317 = vpop.permute.xlu0 %316
        %318 = vrot.lane.b32.xlu0 %v313, 2
        %v319 = vpop.permute.xlu0 %318
        %vm322 = vcmask 15360
        %v323 = vsel %vm322, 0.0, %v317
        %v324 = vsel %vm322, 0.0, %v319
        %vm325 = vcmask 146432
        %v326 = vsel %vm325, %v323, 0.0
        %v327 = vsel %vm325, %v324, 0.0
        %v328 = vmul.f32 %v326, 0.02153928
        %v329 = vmul.f32 %v327, 0.02153928
        %v330 = vadd.f32 %v328, 0.0
        %v331 = vadd.f32 %v329, 0.0
        %v332 = vmul.f32 %v326, 0.09653235
        %v333 = vmul.f32 %v327, 0.09653235
        %336 = vrot.lane.b32.xlu0 %v332, 127
        %v337 = vpop.permute.xlu0 %336
        %338 = vrot.lane.b32.xlu0 %v333, 127
        %v339 = vpop.permute.xlu0 %338
        %v342 = vadd.f32 %v330, %v337
        %v343 = vadd.f32 %v331, %v339
        %v344 = vmul.f32 %v326, 0.15915494
        %v345 = vmul.f32 %v327, 0.15915494
        %348 = vrot.lane.b32.xlu0 %v344, 126
        %v349 = vpop.permute.xlu0 %348
        %350 = vrot.lane.b32.xlu0 %v345, 126
        %v351 = vpop.permute.xlu0 %350
        %v354 = vadd.f32 %v342, %v349
        %v355 = vadd.f32 %v343, %v351
        %356 = vrot.lane.b32.xlu0 %v332, 125
        %v357 = vpop.permute.xlu0 %356
        %358 = vrot.lane.b32.xlu0 %v333, 125
        %v359 = vpop.permute.xlu0 %358
        %v362 = vadd.f32 %v354, %v357
        %v363 = vadd.f32 %v355, %v359
        %366 = vrot.lane.b32.xlu0 %v328, 124
        %v367 = vpop.permute.xlu0 %366
        %368 = vrot.lane.b32.xlu0 %v329, 124
        %v369 = vpop.permute.xlu0 %368
        %v372 = vadd.f32 %v362, %v367
        %v373 = vadd.f32 %v363, %v369
        %v376 = vrot.slane %v244, 6
        %v377 = vrot.slane %v246, 6
        %v378 = vsel %vm249, %v376, %v377
        %v382 = vsel %vm249, 0.0, %v376
        %v383 = vsel %vm249, %v377, 0.0
        %v384 = vmul.f32 %v382, 0.13533528
        %v385 = vmul.f32 %v378, 0.13533528
        %v386 = vadd.f32 %v384, 0.0
        %v387 = vadd.f32 %v385, 0.0
        %v388 = vmul.f32 %v382, 0.60653067
        %v389 = vmul.f32 %v378, 0.60653067
        %v390 = vmul.f32 %v383, 0.60653067
        %v394 = vrot.slane %v388, 1
        %v395 = vrot.slane %v389, 1
        %v396 = vsel %vm268, %v394, %v395
        %v397 = vrot.slane %v390, 1
        %v398 = vsel %vm268, %v395, %v397
        %v401 = vadd.f32 %v386, %v396
        %v402 = vadd.f32 %v387, %v398
        %v405 = vrot.slane %v382, 2
        %v406 = vrot.slane %v378, 2
        %v407 = vsel %vm280, %v405, %v406
        %v408 = vrot.slane %v383, 2
        %v409 = vsel %vm280, %v406, %v408
        %v412 = vadd.f32 %v401, %v407
        %v413 = vadd.f32 %v402, %v409
        %v414 = vrot.slane %v388, 3
        %v415 = vrot.slane %v389, 3
        %v416 = vsel %vm290, %v414, %v415
        %v417 = vrot.slane %v390, 3
        %v418 = vsel %vm290, %v415, %v417
        %v421 = vadd.f32 %v412, %v416
        %v422 = vadd.f32 %v413, %v418
        %v423 = vmul.f32 %v383, 0.13533528
        %v427 = vrot.slane %v384, 4
        %v428 = vrot.slane %v385, 4
        %v429 = vsel %vm304, %v427, %v428
        %v430 = vrot.slane %v423, 4
        %v431 = vsel %vm304, %v428, %v430
        %v434 = vadd.f32 %v421, %v429
        %v435 = vadd.f32 %v422, %v431
        %438 = vrot.lane.b32.xlu0 %v434, 2
        %v439 = vpop.permute.xlu0 %438
        %440 = vrot.lane.b32.xlu0 %v435, 2
        %v441 = vpop.permute.xlu0 %440
        %v444 = vsel %vm322, 0.0, %v439
        %v445 = vsel %vm322, 0.0, %v441
        %v446 = vsel %vm325, %v444, 0.0
        %v447 = vsel %vm325, %v445, 0.0
        %v448 = vmul.f32 %v446, 0.02153928
        %v449 = vmul.f32 %v447, 0.02153928
        %v450 = vadd.f32 %v448, 0.0
        %v451 = vadd.f32 %v449, 0.0
        %v452 = vmul.f32 %v446, 0.09653235
        %v453 = vmul.f32 %v447, 0.09653235
        %456 = vrot.lane.b32.xlu0 %v452, 127
        %v457 = vpop.permute.xlu0 %456
        %458 = vrot.lane.b32.xlu0 %v453, 127
        %v459 = vpop.permute.xlu0 %458
        %v462 = vadd.f32 %v450, %v457
        %v463 = vadd.f32 %v451, %v459
        %v464 = vmul.f32 %v446, 0.15915494
        %v465 = vmul.f32 %v447, 0.15915494
        %468 = vrot.lane.b32.xlu0 %v464, 126
        %v469 = vpop.permute.xlu0 %468
        %470 = vrot.lane.b32.xlu0 %v465, 126
        %v471 = vpop.permute.xlu0 %470
        %v474 = vadd.f32 %v462, %v469
        %v475 = vadd.f32 %v463, %v471
        %476 = vrot.lane.b32.xlu0 %v452, 125
        %v477 = vpop.permute.xlu0 %476
        %478 = vrot.lane.b32.xlu0 %v453, 125
        %v479 = vpop.permute.xlu0 %478
        %v482 = vadd.f32 %v474, %v477
        %v483 = vadd.f32 %v475, %v479
        %486 = vrot.lane.b32.xlu0 %v448, 124
        %v487 = vpop.permute.xlu0 %486
        %488 = vrot.lane.b32.xlu0 %v449, 124
        %v489 = vpop.permute.xlu0 %488
        %v492 = vadd.f32 %v482, %v487
        %v493 = vadd.f32 %v483, %v489
        %v494 = vsub.f32 %v372, %v492
        %v495 = vsub.f32 %v373, %v493
        %v496 = vxor.u32 %v494, 2147483648
        %v497 = vxor.u32 %v495, 2147483648
        %v498 = vmul.f32 %v496, 1.442695
        %v499 = vpow.pop %v498
        %v500 = vmul.f32 %v497, 1.442695
        %v501 = vpow.pop %v500
        %v502 = vadd.f32 %v499, 1.0
        %v503 = vadd.f32 %v501, 1.0
        %v504 = vrcp.pop %v502
        %v505 = vmul.f32 1.0, %v504
        %v506 = vrcp.pop %v503
        %v507 = vmul.f32 1.0, %v506
        %508 = vst.msk [vmem:[%s201] sm:$0xff] %vm206, %v505
        %509 = vst.msk [vmem:[%s201 + $0x8] sm:$0xff] %vm206, %v507
        %s510 = sand.u32 %s82, 1
        %s511 = scalar_lea.sflag [#allocation4], %s510
        %s512 = sand.u32 %s82, 1
        %s513 = smul.addr %s512, 16
        %s514 = scalar_lea.vmem [#allocation7], %s513
        // Predicated region
        $region37: #{tpu_custom_call.1} parent=27 // pred_check
          %p515 = pneg %p92
        $region38: #{tpu_custom_call.1} parent=27 // pred_check_branch
          %517 = sbr.rel (%p515) target = $region40
        $region39: #{tpu_custom_call.1} parent=27 // pred_region
          %s519 = ssub.s32 256, 256
          %520 = vsyncadd %s511, %s519
          %s521 = smul.addr %s22, 2
          %s522 = smul.addr %s521, 128
          %s523 = scalar_lea.hbm %s2, %s522
          %s524 = sshll.u32 %s514, 4
          %s525 = int_to_ptr.vmem [resolvable:$true] %s524
          %530 = dma.vmem_to_hbm [thread:$0]  %s525, 256, %s523, %s511, 128, 128, 8
        $region40: #{tpu_custom_call.1} parent=27 // pred_fallthru
          _
      $region28: #{tpu_custom_call.1} parent=5 // pred_fallthru
        _
      %p531 = scmp.le.s32.totalorder 2, %s17
      // Predicated region
      $region41: #{tpu_custom_call.1} parent=5 // pred_check
        %p532 = pneg %p531
      $region42: #{tpu_custom_call.1} parent=5 // pred_check_branch
        %534 = sbr.rel (%p532) target = $region44
      $region43: #{tpu_custom_call.1} parent=5 // pred_region
        %s535 = ssub.s32 %s17, 2
        // Predicated region
        $region45: #{tpu_custom_call.1} parent=43 // pred_check
          %p536 = pneg %p98
        $region46: #{tpu_custom_call.1} parent=43 // pred_check_branch
          %538 = sbr.rel (%p536) target = $region48
        $region47: #{tpu_custom_call.1} parent=43 // pred_region
          %s539 = sand.u32 %s83, 1
          %s540 = scalar_lea.sflag [#allocation4], %s539
          %s541 = sand.u32 %s83, 1
          %s542 = smul.addr %s541, 16
          %s543 = scalar_lea.vmem [#allocation7], %s542
          %544 = dma.done %s540, 256
        $region48: #{tpu_custom_call.1} parent=43 // pred_fallthru
          _
      $region44: #{tpu_custom_call.1} parent=5 // pred_fallthru
        _
    $region6: #{tpu_custom_call.1} parent=1 // loop_footer
      %s21 = sadd.s32 1, %s17
    $region7: #{tpu_custom_call.1} parent=1 // loop_footer_branch
      %16 = sbr.rel target = $region3
    $region8: #{tpu_custom_call.1} parent=1 // loop_exit
      _
    %545 = vsyncpa [#allocation3], 1
    %s546 = scalar_lea.sflag [#allocation3], 1
    %547 = vsyncpa %s546, 1
    %548 = vsyncpa [#allocation6], 1
    %s549 = scalar_lea.sflag [#allocation6], 1
    %550 = vsyncpa %s549, 1
    %551 = vsyncpa [#allocation4], 1
    %s552 = scalar_lea.sflag [#allocation4], 1
    %553 = vsyncpa %s552, 1

</llo_original>
